<compile_context>
chip_gen: v7x
topology: tpu7x:2x2x1
jax: 0.10.0
libtpu: 0.0.40
codegen_flags: <defaults>
</compile_context>

<pallas_src>
import jax
import jax.numpy as jnp
import numpy as np
from jax import lax
from jax.experimental import pallas as pl
from jax.experimental.pallas import tpu as pltpu

AUG_SIZE = 250   # module asserts x.size(-1) == x.size(-2) == 250
OUT_SIZE = 224


def _interp_matrix_np(out_size: int, in_size: int, scale: float) -> np.ndarray:
    """Row-interpolation matrix reproducing F.affine_grid + F.grid_sample
    semantics (align_corners=False, padding_mode='zeros') for a pure-scale
    theta along one axis.  Shape: (out_size, in_size)."""
    o = np.arange(out_size, dtype=np.float64)
    norm = scale * ((2.0 * o + 1.0) / out_size - 1.0)   # affine_grid coords * theta
    pix = ((norm + 1.0) * in_size - 1.0) / 2.0          # grid_sample un-normalization
    i0 = np.floor(pix).astype(np.int64)
    w1 = pix - i0
    w0 = 1.0 - w1
    m = np.zeros((out_size, in_size), dtype=np.float64)
    rows = np.arange(out_size)
    for idx, w in ((i0, w0), (i0 + 1, w1)):
        ok = (idx >= 0) & (idx < in_size)               # zeros padding: drop OOB taps
        m[rows[ok], idx[ok]] += w[ok]
    return m


# Constant, tiny weights: build once at import time (hoisted out of every call).
# bf16 inputs for MXU throughput; accumulation stays f32 inside the kernel.
_SCALE = float(OUT_SIZE) / float(AUG_SIZE)              # theta = diag(scale, scale)
_WY = jnp.asarray(_interp_matrix_np(OUT_SIZE, AUG_SIZE, _SCALE), dtype=jnp.bfloat16)
_WXT = jnp.asarray(_interp_matrix_np(OUT_SIZE, AUG_SIZE, _SCALE).T, dtype=jnp.bfloat16)


def _plane_batch_for_device() -> int:
    """Planes per grid step, sized per TPU generation (VMEM scoped budget)."""
    try:
        kind = jax.devices()[0].device_kind.lower()
    except Exception:
        return 8
    if ("v6" in kind) or ("v7" in kind) or ("7x" in kind):
        return 16          # v6e: 32 MiB default scoped; v7x: 64 MiB physical
    return 8               # v5e / unknown: stay within the 16 MiB default budget


def _resample_kernel(wy_ref, wxT_ref, x_ref, o_ref, tmp_ref):
    """Per grid step: B planes.  out[i] = Wy @ (x[i] @ Wx^T), both on the MXU.

    bf16 operands, f32 accumulation (preferred_element_type); the (250, 224)
    intermediate goes through an explicit VMEM scratch to keep vreg pressure low.
    """
    b = x_ref.shape[0]

    def one_plane(i, carry):
        xb = x_ref[i].astype(jnp.bfloat16)                       # (250, 250)
        tmp_ref[...] = jnp.dot(
            xb, wxT_ref[...], preferred_element_type=jnp.float32
        ).astype(jnp.bfloat16)                                   # (250, 224)
        o_ref[i] = jnp.dot(
            wy_ref[...], tmp_ref[...], preferred_element_type=jnp.float32
        ).astype(o_ref.dtype)                                    # (224, 224)
        return carry

    lax.fori_loop(0, b, one_plane, 0)


def ppr_forward(x: jnp.ndarray, plane_batch: int | None = None) -> jnp.ndarray:
    n, c, h, w = x.shape
    assert h == AUG_SIZE and w == AUG_SIZE
    planes = n * c

    if plane_batch is None:
        plane_batch = _plane_batch_for_device()
    b = max(1, min(plane_batch, planes))
    if planes > 1:
        # Keep >= 2 grid steps so v7x's two TensorCores can split the grid.
        b = min(b, pl.cdiv(planes, 2))
    grid = (pl.cdiv(planes, b),)   # partial last block: OOB writes are discarded

    x_flat = x.reshape(planes, h, w)
    out = pl.pallas_call(
        _resample_kernel,
        out_shape=jax.ShapeDtypeStruct((planes, OUT_SIZE, OUT_SIZE), x.dtype),
        grid_spec=pltpu.PrefetchScalarGridSpec(
            num_scalar_prefetch=0,
            grid=grid,
            in_specs=[
                pl.BlockSpec((OUT_SIZE, AUG_SIZE), lambda i: (0, 0)),       # Wy  (resident)
                pl.BlockSpec((AUG_SIZE, OUT_SIZE), lambda i: (0, 0)),       # WxT (resident)
                pl.BlockSpec((b, AUG_SIZE, AUG_SIZE), lambda i: (i, 0, 0)),  # B planes
            ],
            out_specs=pl.BlockSpec((b, OUT_SIZE, OUT_SIZE), lambda i: (i, 0, 0)),
            scratch_shapes=[pltpu.VMEM((AUG_SIZE, OUT_SIZE), jnp.bfloat16)],
        ),
        compiler_params=pltpu.CompilerParams(
            dimension_semantics=("parallel",),
            vmem_limit_bytes=40 * 1024 * 1024,   # fits v5e/v6e/v7x (v7x: 64 MiB phys)
        ),
    )(_WY, _WXT, x_flat)
    return out.reshape(n, c, OUT_SIZE, OUT_SIZE)


def init_unused_params(key):
    """Deterministic init of the __init__ parameters that forward() never
    touches (kept only for shape fidelity)."""
    k1, k2 = jax.random.split(key)
    params = {
        "decoder_w1": jax.random.normal(k1, (512, 32), jnp.float32) * 0.02,
        "decoder_b1": jnp.zeros((32,), jnp.float32),
        "decoder_w2": jax.random.normal(k2, (32, 6), jnp.float32) * 0.02,
        "decoder_b2": jnp.zeros((6,), jnp.float32),
        "bn1d_scale": jnp.ones((6,), jnp.float32),
    }
    # TODO(synk): MobileFacenet encoder is not defined in the reference source
    # and is unused by forward(); its weights are not instantiated here.
    return params


if __name__ == "__main__":
    key = jax.random.PRNGKey(0)
    _ = init_unused_params(key)  # parameters exist but forward() ignores them

    # small batch/channels; spatial must be 250 per the module's assert
    x = jax.random.normal(key, (2, 3, AUG_SIZE, AUG_SIZE), dtype=jnp.float32)

    y = jax.jit(ppr_forward)(x)
    jax.block_until_ready(y)
    assert y.shape == (2, 3, OUT_SIZE, OUT_SIZE)
    assert y.dtype == x.dtype
    print("KERNEL_OK")
</pallas_src>

<mosaic_0001>
module attributes {stable_mosaic.version = 11 : i64} {
  func.func @_resample_kernel(%arg0: i32, %arg1: memref<224x250xbf16, #tpu.memory_space<vmem>>, %arg2: memref<250x224xbf16, #tpu.memory_space<vmem>>, %arg3: memref<3x250x250xf32, #tpu.memory_space<vmem>>, %arg4: memref<3x224x224xf32, #tpu.memory_space<vmem>>, %arg5: memref<250x224xbf16, #tpu.memory_space<vmem>>) attributes {dimension_semantics = [#tpu.dimension_semantics<parallel>], iteration_bounds = array<i64: 2>, scalar_prefetch = 0 : i64, scratch_operands = 1 : i64, tpu.core_type = #tpu.core_type<tc>, window_params = [{pipeline_mode = #tpu.pipeline_mode<synchronous>, transform_indices = @transform_0, window_bounds = array<i64: 224, 250>}, {pipeline_mode = #tpu.pipeline_mode<synchronous>, transform_indices = @transform_1, window_bounds = array<i64: 250, 224>}, {transform_indices = @transform_2, window_bounds = array<i64: 3, 250, 250>}, {transform_indices = @transform_3, window_bounds = array<i64: 3, 224, 224>}]} {
    %c0_i32 = arith.constant 0 : i32
    %c3_i32 = arith.constant 3 : i32
    %0 = arith.addi %c0_i32, %c3_i32 : i32
    %c1_i32 = arith.constant 1 : i32
    scf.for %arg6 = %c0_i32 to %0 step %c1_i32  : i32 {
      %1 = arith.index_cast %arg6 : i32 to index
      %c0 = arith.constant 0 : index
      %c0_1 = arith.constant 0 : index
      %2 = vector.load %arg3[%1, %c0, %c0_1] : memref<3x250x250xf32, #tpu.memory_space<vmem>>, vector<1x250x250xf32>
      %3 = vector.shape_cast %2 : vector<1x250x250xf32> to vector<250x250xf32>
      %4 = arith.truncf %3 : vector<250x250xf32> to vector<250x250xbf16>
      %c0_2 = arith.constant 0 : index
      %c0_3 = arith.constant 0 : index
      %5 = vector.load %arg2[%c0_2, %c0_3] : memref<250x224xbf16, #tpu.memory_space<vmem>>, vector<250x224xbf16>
      %cst = arith.constant dense<0.000000e+00> : vector<250x224xf32>
      %6 = tpu.matmul %4, %5, %cst {dimension_numbers = #tpu.dot_dimension_numbers<[1], [0], [0], [1], [0, 0, 1, 1], [], []>} : vector<250x250xbf16>, vector<250x224xbf16>, vector<250x224xf32> -> vector<250x224xf32>
      %7 = arith.truncf %6 : vector<250x224xf32> to vector<250x224xbf16>
      %c0_4 = arith.constant 0 : index
      %c0_5 = arith.constant 0 : index
      %8 = vector.load %arg5[%c0_4, %c0_5] : memref<250x224xbf16, #tpu.memory_space<vmem>>, vector<250x224xbf16>
      tpu.vector_store %arg5[%c0_4, %c0_5], %7 {strides = array<i32>} : memref<250x224xbf16, #tpu.memory_space<vmem>>, vector<250x224xbf16>,
      %c0_6 = arith.constant 0 : index
      %c0_7 = arith.constant 0 : index
      %9 = vector.load %arg1[%c0_6, %c0_7] : memref<224x250xbf16, #tpu.memory_space<vmem>>, vector<224x250xbf16>
      %c0_8 = arith.constant 0 : index
      %c0_9 = arith.constant 0 : index
      %10 = vector.load %arg5[%c0_8, %c0_9] : memref<250x224xbf16, #tpu.memory_space<vmem>>, vector<250x224xbf16>
      %cst_10 = arith.constant dense<0.000000e+00> : vector<224x224xf32>
      %11 = tpu.matmul %9, %10, %cst_10 {dimension_numbers = #tpu.dot_dimension_numbers<[1], [0], [0], [1], [0, 0, 1, 1], [], []>} : vector<224x250xbf16>, vector<250x224xbf16>, vector<224x224xf32> -> vector<224x224xf32>
      %12 = arith.index_cast %arg6 : i32 to index
      %c0_11 = arith.constant 0 : index
      %c0_12 = arith.constant 0 : index
      %13 = vector.load %arg4[%12, %c0_11, %c0_12] : memref<3x224x224xf32, #tpu.memory_space<vmem>>, vector<1x224x224xf32>
      %14 = vector.shape_cast %13 : vector<1x224x224xf32> to vector<224x224xf32>
      %15 = vector.shape_cast %11 : vector<224x224xf32> to vector<1x224x224xf32>
      tpu.vector_store %arg4[%12, %c0_11, %c0_12], %15 {strides = array<i32>} : memref<3x224x224xf32, #tpu.memory_space<vmem>>, vector<1x224x224xf32>,
    }
    %c3_i32_0 = arith.constant 3 : i32
    return
  }
  func.func @transform_0(%arg0: i32) -> (i32, i32) {
    %c0_i32 = arith.constant 0 : i32
    %c0_i32_0 = arith.constant 0 : i32
    %c0_i32_1 = arith.constant 0 : i32
    return %c0_i32, %c0_i32_0 : i32, i32
  }
  func.func @transform_1(%arg0: i32) -> (i32, i32) {
    %c0_i32 = arith.constant 0 : i32
    %c0_i32_0 = arith.constant 0 : i32
    %c0_i32_1 = arith.constant 0 : i32
    return %c0_i32, %c0_i32_0 : i32, i32
  }
  func.func @transform_2(%arg0: i32) -> (i32, i32, i32) {
    %c0_i32 = arith.constant 0 : i32
    %c0_i32_0 = arith.constant 0 : i32
    %c0_i32_1 = arith.constant 0 : i32
    return %arg0, %c0_i32, %c0_i32_0 : i32, i32, i32
  }
  func.func @transform_3(%arg0: i32) -> (i32, i32, i32) {
    %c0_i32 = arith.constant 0 : i32
    %c0_i32_0 = arith.constant 0 : i32
    %c0_i32_1 = arith.constant 0 : i32
    return %arg0, %c0_i32, %c0_i32_0 : i32, i32, i32
  }
}

</mosaic_0001>

<llo_original>
// kernel: ppr_forward.1
$region0: #{ppr_forward.1}
  #allocation0 [shape = 'u32[]', space=smem, size = 0x4, offset = 0x4, fixed_abs, tag = 'smem constant byte address 0x4 - core index']
  #allocation1 [shape = 'u32[144,128]{1,0:T(1,128)}', space=vmem, size = 0x12000, scoped, tag = 'internal scratch']
  #allocation2 [shape = 'bf16[250,224]{1,0:T(8,128)(2,1)}', space=vmem, size = 0x20000, scoped, tag = 'scratch operand']
  %s0 = inlined_call_operand.vmem [shape: bf16[224,250], index: 0, kind: input, shape index: {}]
  %s1 = inlined_call_operand.vmem [shape: bf16[250,224], index: 1, kind: input, shape index: {}]
  %s2 = inlined_call_operand.vmem [shape: f32[6,250,250], index: 2, kind: input, shape index: {}]
  %s3 = inlined_call_operand.hbm [shape: f32[6,224,224], index: 3, kind: output, shape index: {}]
  %s4 = sld [smem:[#allocation0]]
  $region52: #{ppr_forward.1} parent=0
    _
  %s6 = ssub.s32 1, %s4
  %s7 = scalar_select 0, %s6, %s4
  $region1: #{ppr_forward.1} parent=0
    #allocation3 [shape = 'u8[1376256]{0}', space=vmem, size = 0x150000, scoped, tag = 'output window, operand 0']
    #allocation4 [shape = 's32[2]{0}', space=sflag, size = 0x8, scoped, tag = 'scoped memory for ppr_forward.1']
    %8 = vsyncpa [#allocation4], 0
    %s9 = scalar_lea.sflag [#allocation4], 1
    %10 = vsyncpa %s9, 0
    loop: start=0, step=1, limit=4
    $region2: #{ppr_forward.1} parent=1 // loop_pre_header
      _
    $region3: #{ppr_forward.1} parent=1 // loop_header
      %s12 = sphi 0, %s16
      %p13 = scmp.ge.s32.totalorder %s12, 4
      %s20 = sphi 0, %s20
      %s22 = sphi 0, %s20
      %s23 = sphi 0, %s22
      %s37 = sphi 0, %s23
      %s41 = sphi 0, %s41
      %s43 = sphi 0, %s41
      %s44 = sphi 0, %s43
      %s58 = sphi 0, %s44
      %s64 = sphi 0, %s66
      %s67 = sphi 0, %s64
      %s68 = sphi 0, %s67
      %s84 = sphi 0, %s68
      %s90 = sphi 0, %s92
      %s93 = sphi 0, %s90
      %s94 = sphi 0, %s93
      %s110 = sphi 0, %s94
    $region4: #{ppr_forward.1} parent=1 // loop_header_branch
      %15 = sbr.rel (%p13) target = $region8
    $region5: #{ppr_forward.1} parent=1 // loop_body
      %s17 = ssub.s32 %s12, 1
      %s18 = ssub.s32 %s12, 2
      %s19 = sadd.s32 %s12, 1
      %s21 = sadd.s32 %s20, 1
      %p24 = scmp.eq.s32.totalorder %s12, 1
      %p25 = scmp.ne.s32.totalorder %s20, %s22
      %p26 = scmp.eq.s32.totalorder %s12, 0
      %p27 = por %p25, %p26
      %p28 = scmp.ne.s32.totalorder %s20, %s22
      %p29 = scmp.eq.s32.totalorder %s17, 1
      %p30 = por %p28, %p29
      %p31 = scmp.ne.s32.totalorder %s22, %s23
      %p32 = scmp.eq.s32.totalorder %s17, 0
      %p33 = por %p31, %p32
      %p34 = scmp.ne.s32.totalorder %s22, %s23
      %p35 = scmp.eq.s32.totalorder %s18, 1
      %p36 = por %p34, %p35
      %p38 = scmp.ne.s32.totalorder %s23, %s37
      %p39 = scmp.eq.s32.totalorder %s18, 0
      %p40 = por %p38, %p39
      %s42 = sadd.s32 %s41, 1
      %p45 = scmp.eq.s32.totalorder %s12, 1
      %p46 = scmp.ne.s32.totalorder %s41, %s43
      %p47 = scmp.eq.s32.totalorder %s12, 0
      %p48 = por %p46, %p47
      %p49 = scmp.ne.s32.totalorder %s41, %s43
      %p50 = scmp.eq.s32.totalorder %s17, 1
      %p51 = por %p49, %p50
      %p52 = scmp.ne.s32.totalorder %s43, %s44
      %p53 = scmp.eq.s32.totalorder %s17, 0
      %p54 = por %p52, %p53
      %p55 = scmp.ne.s32.totalorder %s43, %s44
      %p56 = scmp.eq.s32.totalorder %s18, 1
      %p57 = por %p55, %p56
      %p59 = scmp.ne.s32.totalorder %s44, %s58
      %p60 = scmp.eq.s32.totalorder %s18, 0
      %p61 = por %p59, %p60
      %s62 = ssub.s32 %s12, %s19
      %p63 = scmp.eq.s32.totalorder %s62, 0
      %s65 = sadd.s32 %s64, 1
      %s66 = scalar_select %p63, %s64, %s65
      %p69 = pneg %p63
      %p70 = scmp.eq.s32.totalorder %s12, 1
      %p71 = por %p69, %p70
      %p72 = scmp.ne.s32.totalorder %s64, %s67
      %p73 = scmp.eq.s32.totalorder %s12, 0
      %p74 = por %p72, %p73
      %p75 = scmp.ne.s32.totalorder %s64, %s67
      %p76 = scmp.eq.s32.totalorder %s17, 1
      %p77 = por %p75, %p76
      %p78 = scmp.ne.s32.totalorder %s67, %s68
      %p79 = scmp.eq.s32.totalorder %s17, 0
      %p80 = por %p78, %p79
      %p81 = scmp.ne.s32.totalorder %s67, %s68
      %p82 = scmp.eq.s32.totalorder %s18, 1
      %p83 = por %p81, %p82
      %p85 = scmp.ne.s32.totalorder %s68, %s84
      %p86 = scmp.eq.s32.totalorder %s18, 0
      %p87 = por %p85, %p86
      %s88 = ssub.s32 %s12, %s19
      %p89 = scmp.eq.s32.totalorder %s88, 0
      %s91 = sadd.s32 %s90, 1
      %s92 = scalar_select %p89, %s90, %s91
      %p95 = pneg %p89
      %p96 = scmp.eq.s32.totalorder %s12, 1
      %p97 = por %p95, %p96
      %p98 = scmp.ne.s32.totalorder %s90, %s93
      %p99 = scmp.eq.s32.totalorder %s12, 0
      %p100 = por %p98, %p99
      %p101 = scmp.ne.s32.totalorder %s90, %s93
      %p102 = scmp.eq.s32.totalorder %s17, 1
      %p103 = por %p101, %p102
      %p104 = scmp.ne.s32.totalorder %s93, %s94
      %p105 = scmp.eq.s32.totalorder %s17, 0
      %p106 = por %p104, %p105
      %p107 = scmp.ne.s32.totalorder %s93, %s94
      %p108 = scmp.eq.s32.totalorder %s18, 1
      %p109 = por %p107, %p108
      %p111 = scmp.ne.s32.totalorder %s94, %s110
      %p112 = scmp.eq.s32.totalorder %s18, 0
      %p113 = por %p111, %p112
      %p114 = scmp.le.s32.totalorder 1, %s12
      %p115 = scmp.lt.s32.totalorder %s12, 3
      %p116 = pnand %p114, %p115
      %p117 = pneg %p116
      // Predicated region
      $region9: #{ppr_forward.1} parent=5 // pred_check
        _
      $region10: #{ppr_forward.1} parent=5 // pred_check_branch
        %119 = sbr.rel (%p116) target = $region12
      $region11: #{ppr_forward.1} parent=5 // pred_region
        %s120 = ssub.s32 %s12, 1
        // Predicated region
        $region13: #{ppr_forward.1} parent=11 // pred_check
          %p121 = pneg %p33
        $region14: #{ppr_forward.1} parent=11 // pred_check_branch
          %123 = sbr.rel (%p121) target = $region16
        $region15: #{ppr_forward.1} parent=11 // pred_region
          _
        $region16: #{ppr_forward.1} parent=11 // pred_fallthru
          _
        // Predicated region
        $region17: #{ppr_forward.1} parent=11 // pred_check
          %p124 = pneg %p54
        $region18: #{ppr_forward.1} parent=11 // pred_check_branch
          %126 = sbr.rel (%p124) target = $region20
        $region19: #{ppr_forward.1} parent=11 // pred_region
          _
        $region20: #{ppr_forward.1} parent=11 // pred_fallthru
          _
      $region12: #{ppr_forward.1} parent=5 // pred_fallthru
        _
      %p127 = scmp.lt.s32.totalorder %s12, 2
      // Predicated region
      $region21: #{ppr_forward.1} parent=5 // pred_check
        %p128 = pneg %p127
      $region22: #{ppr_forward.1} parent=5 // pred_check_branch
        %130 = sbr.rel (%p128) target = $region24
      $region23: #{ppr_forward.1} parent=5 // pred_region
        // Predicated region
        $region25: #{ppr_forward.1} parent=23 // pred_check
          %p131 = pneg %p74
        $region26: #{ppr_forward.1} parent=23 // pred_check_branch
          %133 = sbr.rel (%p131) target = $region28
        $region27: #{ppr_forward.1} parent=23 // pred_region
          %s134 = smul.u32 3, %s12
          %p135 = scmp.lt.s32.totalorder %s134, 5
          %s136 = scalar_select %p135, %s134, 5
          %s137 = smul.addr %s136, 64
          %s138 = smul.addr %s137, 8
          %s139 = scalar_lea.vmem %s2, %s138
          %s140 = smul.u32 3, %s12
        $region28: #{ppr_forward.1} parent=23 // pred_fallthru
          _
      $region24: #{ppr_forward.1} parent=5 // pred_fallthru
        _
      %p141 = scmp.le.s32.totalorder 1, %s12
      %p142 = scmp.lt.s32.totalorder %s12, 3
      %p143 = pnand %p141, %p142
      %p144 = pneg %p143
      // Predicated region
      $region29: #{ppr_forward.1} parent=5 // pred_check
        _
      $region30: #{ppr_forward.1} parent=5 // pred_check_branch
        %146 = sbr.rel (%p143) target = $region32
      $region31: #{ppr_forward.1} parent=5 // pred_region
        %s147 = ssub.s32 %s12, 1
        %p148 = pneg %p33
        %p149 = pneg %p30
        %p150 = pneg %p54
        %p151 = pneg %p51
        %s152 = smul.u32 3, %s17
        %p153 = scmp.lt.s32.totalorder %s152, 5
        %s154 = scalar_select %p153, %s152, 5
        %s155 = smul.addr %s154, 64
        %s156 = smul.addr %s155, 8
        %s157 = scalar_lea.vmem %s2, %s156
        %p158 = pneg %p80
        %p159 = pneg %p77
        %p160 = pneg %p106
        %p161 = pneg %p103
        %s162 = sand.u32 %s93, 1
        %s163 = scalar_lea.sflag [#allocation4], %s162
        %s164 = sand.u32 %s93, 1
        %s165 = smul.addr %s164, 1344
        %s166 = scalar_lea.vmem [#allocation3], %s165
        %s167 = smul.u32 3, %s17
        %p168 = scmp.lt.s32.totalorder %s167, 5
        %s169 = scalar_select %p168, %s167, 5
        %s170 = smul.addr %s169, 64
        %s171 = smul.addr %s170, 8
        %s172 = scalar_lea.vmem %s2, %s171
        %s173 = smul.u32 3, %s17
        %s174 = smul.u32 3, %s17
        loop: start=0, step=1, limit=3
        $region33: #{ppr_forward.1} parent=31 // loop_pre_header
          _
        $region34: #{ppr_forward.1} parent=31 // loop_header
          %s176 = sphi 0, %s180
          %p177 = scmp.ge.s32.totalorder %s176, 3
        $region35: #{ppr_forward.1} parent=31 // loop_header_branch
          %179 = sbr.rel (%p177) target = $region39
        $region36: #{ppr_forward.1} parent=31 // loop_body
          %s181 = smul.u32 %s176, 64
          %s182 = smul.addr %s181, 8
          %s183 = scalar_lea.vmem %s172, %s182
          %v184 = vld [vmem:[%s183] sm:$0xff]
          %v185 = vld [vmem:[%s183 + $0x8] sm:$0xff]
          %v186 = vld [vmem:[%s183 + $0x10] sm:$0xff]
          %v187 = vld [vmem:[%s183 + $0x18] sm:$0xff]
          %v188 = vld [vmem:[%s183 + $0x20] sm:$0xff]
          %v189 = vld [vmem:[%s183 + $0x28] sm:$0xff]
          %v190 = vld [vmem:[%s183 + $0x30] sm:$0xff]
          %v191 = vld [vmem:[%s183 + $0x38] sm:$0xff]
          %v192 = vld [vmem:[%s183 + $0x40] sm:$0xff]
          %v193 = vld [vmem:[%s183 + $0x48] sm:$0xff]
          %v194 = vld [vmem:[%s183 + $0x50] sm:$0xff]
          %v195 = vld [vmem:[%s183 + $0x58] sm:$0xff]
          %v196 = vld [vmem:[%s183 + $0x60] sm:$0xff]
          %v197 = vld [vmem:[%s183 + $0x68] sm:$0xff]
          %v198 = vld [vmem:[%s183 + $0x70] sm:$0xff]
          %v199 = vld [vmem:[%s183 + $0x78] sm:$0xff]
          %v200 = vld [vmem:[%s183 + $0x80] sm:$0xff]
          %v201 = vld [vmem:[%s183 + $0x88] sm:$0xff]
          %v202 = vld [vmem:[%s183 + $0x90] sm:$0xff]
          %v203 = vld [vmem:[%s183 + $0x98] sm:$0xff]
          %v204 = vld [vmem:[%s183 + $0xa0] sm:$0xff]
          %v205 = vld [vmem:[%s183 + $0xa8] sm:$0xff]
          %v206 = vld [vmem:[%s183 + $0xb0] sm:$0xff]
          %v207 = vld [vmem:[%s183 + $0xb8] sm:$0xff]
          %v208 = vld [vmem:[%s183 + $0xc0] sm:$0xff]
          %v209 = vld [vmem:[%s183 + $0xc8] sm:$0xff]
          %v210 = vld [vmem:[%s183 + $0xd0] sm:$0xff]
          %v211 = vld [vmem:[%s183 + $0xd8] sm:$0xff]
          %v212 = vld [vmem:[%s183 + $0xe0] sm:$0xff]
          %v213 = vld [vmem:[%s183 + $0xe8] sm:$0xff]
          %v214 = vld [vmem:[%s183 + $0xf0] sm:$0xff]
          %v215 = vld [vmem:[%s183 + $0xf8] sm:$0xff]
          %v216 = vld [vmem:[%s183 + $0x100] sm:$0xff]
          %v217 = vld [vmem:[%s183 + $0x108] sm:$0xff]
          %v218 = vld [vmem:[%s183 + $0x110] sm:$0xff]
          %v219 = vld [vmem:[%s183 + $0x118] sm:$0xff]
          %v220 = vld [vmem:[%s183 + $0x120] sm:$0xff]
          %v221 = vld [vmem:[%s183 + $0x128] sm:$0xff]
          %v222 = vld [vmem:[%s183 + $0x130] sm:$0xff]
          %v223 = vld [vmem:[%s183 + $0x138] sm:$0xff]
          %v224 = vld [vmem:[%s183 + $0x140] sm:$0xff]
          %v225 = vld [vmem:[%s183 + $0x148] sm:$0xff]
          %v226 = vld [vmem:[%s183 + $0x150] sm:$0xff]
          %v227 = vld [vmem:[%s183 + $0x158] sm:$0xff]
          %v228 = vld [vmem:[%s183 + $0x160] sm:$0xff]
          %v229 = vld [vmem:[%s183 + $0x168] sm:$0xff]
          %v230 = vld [vmem:[%s183 + $0x170] sm:$0xff]
          %v231 = vld [vmem:[%s183 + $0x178] sm:$0xff]
          %v232 = vld [vmem:[%s183 + $0x180] sm:$0xff]
          %v233 = vld [vmem:[%s183 + $0x188] sm:$0xff]
          %v234 = vld [vmem:[%s183 + $0x190] sm:$0xff]
          %v235 = vld [vmem:[%s183 + $0x198] sm:$0xff]
          %v236 = vld [vmem:[%s183 + $0x1a0] sm:$0xff]
          %v237 = vld [vmem:[%s183 + $0x1a8] sm:$0xff]
          %v238 = vld [vmem:[%s183 + $0x1b0] sm:$0xff]
          %v239 = vld [vmem:[%s183 + $0x1b8] sm:$0xff]
          %v240 = vld [vmem:[%s183 + $0x1c0] sm:$0xff]
          %v241 = vld [vmem:[%s183 + $0x1c8] sm:$0xff]
          %v242 = vld [vmem:[%s183 + $0x1d0] sm:$0xff]
          %v243 = vld [vmem:[%s183 + $0x1d8] sm:$0xff]
          %v244 = vld [vmem:[%s183 + $0x1e0] sm:$0xff]
          %v245 = vld [vmem:[%s183 + $0x1e8] sm:$0xff]
          %v246 = vld [vmem:[%s183 + $0x1f0] sm:$0x3]
          %v247 = vld [vmem:[%s183 + $0x1f8] sm:$0x3]
          %v248 = vpack.c.bf16 %v186, %v184
          %v249 = vpack.c.bf16 %v187, %v185
          %v250 = vpack.c.bf16 %v190, %v188
          %v251 = vpack.c.bf16 %v191, %v189
          %v252 = vpack.c.bf16 %v194, %v192
          %v253 = vpack.c.bf16 %v195, %v193
          %v254 = vpack.c.bf16 %v198, %v196
          %v255 = vpack.c.bf16 %v199, %v197
          %v256 = vpack.c.bf16 %v202, %v200
          %v257 = vpack.c.bf16 %v203, %v201
          %v258 = vpack.c.bf16 %v206, %v204
          %v259 = vpack.c.bf16 %v207, %v205
          %v260 = vpack.c.bf16 %v210, %v208
          %v261 = vpack.c.bf16 %v211, %v209
          %v262 = vpack.c.bf16 %v214, %v212
          %v263 = vpack.c.bf16 %v215, %v213
          %v264 = vpack.c.bf16 %v218, %v216
          %v265 = vpack.c.bf16 %v219, %v217
          %v266 = vpack.c.bf16 %v222, %v220
          %v267 = vpack.c.bf16 %v223, %v221
          %v268 = vpack.c.bf16 %v226, %v224
          %v269 = vpack.c.bf16 %v227, %v225
          %v270 = vpack.c.bf16 %v230, %v228
          %v271 = vpack.c.bf16 %v231, %v229
          %v272 = vpack.c.bf16 %v234, %v232
          %v273 = vpack.c.bf16 %v235, %v233
          %v274 = vpack.c.bf16 %v238, %v236
          %v275 = vpack.c.bf16 %v239, %v237
          %v276 = vpack.c.bf16 %v242, %v240
          %v277 = vpack.c.bf16 %v243, %v241
          %v278 = vpack.c.bf16 %v246, %v244
          %v279 = vpack.c.bf16 %v247, %v245
          %v280 = vld [vmem:[%s1] sm:$0xff]
          %v281 = vld [vmem:[%s1 + $0x8] sm:$0xff]
          %v282 = vld [vmem:[%s1 + $0x10] sm:$0xff]
          %v283 = vld [vmem:[%s1 + $0x18] sm:$0xff]
          %v284 = vld [vmem:[%s1 + $0x20] sm:$0xff]
          %v285 = vld [vmem:[%s1 + $0x28] sm:$0xff]
          %v286 = vld [vmem:[%s1 + $0x30] sm:$0xff]
          %v287 = vld [vmem:[%s1 + $0x38] sm:$0xff]
          %v288 = vld [vmem:[%s1 + $0x40] sm:$0xff]
          %v289 = vld [vmem:[%s1 + $0x48] sm:$0xff]
          %v290 = vld [vmem:[%s1 + $0x50] sm:$0xff]
          %v291 = vld [vmem:[%s1 + $0x58] sm:$0xff]
          %v292 = vld [vmem:[%s1 + $0x60] sm:$0xff]
          %v293 = vld [vmem:[%s1 + $0x68] sm:$0xff]
          %v294 = vld [vmem:[%s1 + $0x70] sm:$0xff]
          %v295 = vld [vmem:[%s1 + $0x78] sm:$0xff]
          %v296 = vld [vmem:[%s1 + $0x80] sm:$0xff]
          %v297 = vld [vmem:[%s1 + $0x88] sm:$0xff]
          %v298 = vld [vmem:[%s1 + $0x90] sm:$0xff]
          %v299 = vld [vmem:[%s1 + $0x98] sm:$0xff]
          %v300 = vld [vmem:[%s1 + $0xa0] sm:$0xff]
          %v301 = vld [vmem:[%s1 + $0xa8] sm:$0xff]
          %v302 = vld [vmem:[%s1 + $0xb0] sm:$0xff]
          %v303 = vld [vmem:[%s1 + $0xb8] sm:$0xff]
          %v304 = vld [vmem:[%s1 + $0xc0] sm:$0xff]
          %v305 = vld [vmem:[%s1 + $0xc8] sm:$0xff]
          %v306 = vld [vmem:[%s1 + $0xd0] sm:$0xff]
          %v307 = vld [vmem:[%s1 + $0xd8] sm:$0xff]
          %v308 = vld [vmem:[%s1 + $0xe0] sm:$0xff]
          %v309 = vld [vmem:[%s1 + $0xe8] sm:$0xff]
          %v310 = vld [vmem:[%s1 + $0xf0] sm:$0xff]
          %v311 = vld [vmem:[%s1 + $0xf8] sm:$0x11]
          %v344 = vunpack.c.l.b16 %v280
          %v345 = vunpack.c.h.b16 %v280
          %v346 = vunpack.c.l.b16 %v281
          %v347 = vunpack.c.h.b16 %v281
          %v348 = vunpack.c.l.b16 %v282
          %v349 = vunpack.c.h.b16 %v282
          %v350 = vunpack.c.l.b16 %v283
          %v351 = vunpack.c.h.b16 %v283
          %v352 = vunpack.c.l.b16 %v284
          %v353 = vunpack.c.h.b16 %v284
          %v354 = vunpack.c.l.b16 %v285
          %v355 = vunpack.c.h.b16 %v285
          %v356 = vunpack.c.l.b16 %v286
          %v357 = vunpack.c.h.b16 %v286
          %v358 = vunpack.c.l.b16 %v287
          %v359 = vunpack.c.h.b16 %v287
          %v360 = vunpack.c.l.b16 %v288
          %v361 = vunpack.c.h.b16 %v288
          %v362 = vunpack.c.l.b16 %v289
          %v363 = vunpack.c.h.b16 %v289
          %v364 = vunpack.c.l.b16 %v290
          %v365 = vunpack.c.h.b16 %v290
          %v366 = vunpack.c.l.b16 %v291
          %v367 = vunpack.c.h.b16 %v291
          %v368 = vunpack.c.l.b16 %v292
          %v369 = vunpack.c.h.b16 %v292
          %v370 = vunpack.c.l.b16 %v293
          %v371 = vunpack.c.h.b16 %v293
          %v372 = vunpack.c.l.b16 %v294
          %v373 = vunpack.c.h.b16 %v294
          %v374 = vunpack.c.l.b16 %v295
          %v375 = vunpack.c.h.b16 %v295
          %v376 = vunpack.c.l.b16 %v296
          %v377 = vunpack.c.h.b16 %v296
          %v378 = vunpack.c.l.b16 %v297
          %v379 = vunpack.c.h.b16 %v297
          %v380 = vunpack.c.l.b16 %v298
          %v381 = vunpack.c.h.b16 %v298
          %v382 = vunpack.c.l.b16 %v299
          %v383 = vunpack.c.h.b16 %v299
          %v384 = vunpack.c.l.b16 %v300
          %v385 = vunpack.c.h.b16 %v300
          %v386 = vunpack.c.l.b16 %v301
          %v387 = vunpack.c.h.b16 %v301
          %v388 = vunpack.c.l.b16 %v302
          %v389 = vunpack.c.h.b16 %v302
          %v390 = vunpack.c.l.b16 %v303
          %v391 = vunpack.c.h.b16 %v303
          %v392 = vunpack.c.l.b16 %v304
          %v393 = vunpack.c.h.b16 %v304
          %v394 = vunpack.c.l.b16 %v305
          %v395 = vunpack.c.h.b16 %v305
          %v396 = vunpack.c.l.b16 %v306
          %v397 = vunpack.c.h.b16 %v306
          %v398 = vunpack.c.l.b16 %v307
          %v399 = vunpack.c.h.b16 %v307
          %v400 = vunpack.c.l.b16 %v308
          %v401 = vunpack.c.h.b16 %v308
          %v402 = vunpack.c.l.b16 %v309
          %v403 = vunpack.c.h.b16 %v309
          %v404 = vunpack.c.l.b16 %v310
          %v405 = vunpack.c.h.b16 %v310
          %v406 = vunpack.c.l.b16 %v311
          %v407 = vunpack.c.h.b16 %v311
          %v408 = vpack.c.b16 %v346, %v344
          %v409 = vpack.c.b16 %v347, %v345
          %v410 = vpack.c.b16 %v350, %v348
          %v411 = vpack.c.b16 %v351, %v349
          %v412 = vpack.c.b16 %v354, %v352
          %v413 = vpack.c.b16 %v355, %v353
          %v414 = vpack.c.b16 %v358, %v356
          %v415 = vpack.c.b16 %v359, %v357
          %v416 = vpack.c.b16 %v362, %v360
          %v417 = vpack.c.b16 %v363, %v361
          %v418 = vpack.c.b16 %v366, %v364
          %v419 = vpack.c.b16 %v367, %v365
          %v420 = vpack.c.b16 %v370, %v368
          %v421 = vpack.c.b16 %v371, %v369
          %v422 = vpack.c.b16 %v374, %v372
          %v423 = vpack.c.b16 %v375, %v373
          %v424 = vpack.c.b16 %v378, %v376
          %v425 = vpack.c.b16 %v379, %v377
          %v426 = vpack.c.b16 %v382, %v380
          %v427 = vpack.c.b16 %v383, %v381
          %v428 = vpack.c.b16 %v386, %v384
          %v429 = vpack.c.b16 %v387, %v385
          %v430 = vpack.c.b16 %v390, %v388
          %v431 = vpack.c.b16 %v391, %v389
          %v432 = vpack.c.b16 %v394, %v392
          %v433 = vpack.c.b16 %v395, %v393
          %v434 = vpack.c.b16 %v398, %v396
          %v435 = vpack.c.b16 %v399, %v397
          %v436 = vpack.c.b16 %v402, %v400
          %v437 = vpack.c.b16 %v403, %v401
          %v438 = vpack.c.b16 %v406, %v404
          %v439 = vpack.c.b16 %v407, %v405
          %vm470 = vcmask 998400
          %v472 = vsel %vm470, %v249, 0
          %v475 = vsel %vm470, %v251, 0
          %v478 = vsel %vm470, %v253, 0
          %v481 = vsel %vm470, %v255, 0
          %v484 = vsel %vm470, %v257, 0
          %v487 = vsel %vm470, %v259, 0
          %v490 = vsel %vm470, %v261, 0
          %v493 = vsel %vm470, %v263, 0
          %v496 = vsel %vm470, %v265, 0
          %v499 = vsel %vm470, %v267, 0
          %v502 = vsel %vm470, %v269, 0
          %v505 = vsel %vm470, %v271, 0
          %v508 = vsel %vm470, %v273, 0
          %v511 = vsel %vm470, %v275, 0
          %v514 = vsel %vm470, %v277, 0
          %v517 = vsel %vm470, %v279, 0
          %vm519 = vcmask 1044480
          %v521 = vsel %vm519, %v438, 0
          %v524 = vsel %vm519, %v439, 0
          %526 = vmatprep.subr.bf16.mxu0 %v409
          %527 = vmatpush1.bf16.msra.mxu0 %v408
          %528 = vmatprep.subr.bf16.mxu0 %v411
          %529 = vmatpush1.bf16.msra.mxu0 %v410
          %530 = vmatprep.subr.bf16.mxu0 %v413
          %531 = vmatpush1.bf16.msra.mxu0 %v412
          %532 = vmatprep.subr.bf16.mxu0 %v415
          %533 = vmatpush1.bf16.msra.mxu0 %v414
          %534 = vmatprep.subr.bf16.mxu0 %v417
          %535 = vmatpush1.bf16.msra.mxu0 %v416
          %536 = vmatprep.subr.bf16.mxu0 %v419
          %537 = vmatpush1.bf16.msra.mxu0 %v418
          %538 = vmatprep.subr.bf16.mxu0 %v421
          %539 = vmatpush1.bf16.msra.mxu0 %v420
          %540 = vmatprep.subr.bf16.mxu0 %v423
          %541 = vmatpush1.bf16.msra.mxu0 %v422
          %542 = vmatprep.subr.bf16.mxu0 %v425
          %543 = vmatpush1.bf16.msra.mxu0 %v424
          %544 = vmatprep.subr.bf16.mxu0 %v427
          %545 = vmatpush1.bf16.msra.mxu0 %v426
          %546 = vmatprep.subr.bf16.mxu0 %v429
          %547 = vmatpush1.bf16.msra.mxu0 %v428
          %548 = vmatprep.subr.bf16.mxu0 %v431
          %549 = vmatpush1.bf16.msra.mxu0 %v430
          %550 = vmatprep.subr.bf16.mxu0 %v433
          %551 = vmatpush1.bf16.msra.mxu0 %v432
          %552 = vmatprep.subr.bf16.mxu0 %v435
          %553 = vmatpush1.bf16.msra.mxu0 %v434
          %554 = vmatprep.subr.bf16.mxu0 %v437
          %555 = vmatpush1.bf16.msra.mxu0 %v436
          %556 = vmatprep.subr.bf16.mxu0 %v524
          %557 = vmatpush1.bf16.msra.mxu0 %v521
          %558 = vmatprep.mubr.bf16.mxu0 %v472
          %559 = vmatmul.mubr.bf16.gmra.mrb[0].mxu0 %v248
          %v560 = vpop.f32.mrb[0].mxu0
          %v561 = vadd.f32 0.0, %v560
          %v562 = vpop.f32.mrb[0].mxu0
          %v563 = vadd.f32 0.0, %v562
          %v564 = vpop.f32.mrb[0].mxu0
          %v565 = vadd.f32 0.0, %v564
          %v566 = vpop.f32.mrb[0].mxu0
          %v567 = vadd.f32 0.0, %v566
          %568 = vmatprep.mubr.bf16.mxu0 %v475
          %569 = vmatmul.mubr.bf16.gmra.mrb[0].mxu0 %v250
          %v570 = vpop.f32.mrb[0].mxu0
          %v571 = vadd.f32 0.0, %v570
          %v572 = vpop.f32.mrb[0].mxu0
          %v573 = vadd.f32 0.0, %v572
          %v574 = vpop.f32.mrb[0].mxu0
          %v575 = vadd.f32 0.0, %v574
          %v576 = vpop.f32.mrb[0].mxu0
          %v577 = vadd.f32 0.0, %v576
          %578 = vmatprep.mubr.bf16.mxu0 %v478
          %579 = vmatmul.mubr.bf16.gmra.mrb[0].mxu0 %v252
          %v580 = vpop.f32.mrb[0].mxu0
          %v581 = vadd.f32 0.0, %v580
          %v582 = vpop.f32.mrb[0].mxu0
          %v583 = vadd.f32 0.0, %v582
          %v584 = vpop.f32.mrb[0].mxu0
          %v585 = vadd.f32 0.0, %v584
          %v586 = vpop.f32.mrb[0].mxu0
          %v587 = vadd.f32 0.0, %v586
          %588 = vmatprep.mubr.bf16.mxu0 %v481
          %589 = vmatmul.mubr.bf16.gmra.mrb[0].mxu0 %v254
          %v590 = vpop.f32.mrb[0].mxu0
          %v591 = vadd.f32 0.0, %v590
          %v592 = vpop.f32.mrb[0].mxu0
          %v593 = vadd.f32 0.0, %v592
          %v594 = vpop.f32.mrb[0].mxu0
          %v595 = vadd.f32 0.0, %v594
          %v596 = vpop.f32.mrb[0].mxu0
          %v597 = vadd.f32 0.0, %v596
          %598 = vmatprep.mubr.bf16.mxu0 %v484
          %599 = vmatmul.mubr.bf16.gmra.mrb[0].mxu0 %v256
          %v600 = vpop.f32.mrb[0].mxu0
          %v601 = vadd.f32 0.0, %v600
          %v602 = vpop.f32.mrb[0].mxu0
          %v603 = vadd.f32 0.0, %v602
          %v604 = vpop.f32.mrb[0].mxu0
          %v605 = vadd.f32 0.0, %v604
          %v606 = vpop.f32.mrb[0].mxu0
          %v607 = vadd.f32 0.0, %v606
          %608 = vmatprep.mubr.bf16.mxu0 %v487
          %609 = vmatmul.mubr.bf16.gmra.mrb[0].mxu0 %v258
          %v610 = vpop.f32.mrb[0].mxu0
          %v611 = vadd.f32 0.0, %v610
          %v612 = vpop.f32.mrb[0].mxu0
          %v613 = vadd.f32 0.0, %v612
          %v614 = vpop.f32.mrb[0].mxu0
          %v615 = vadd.f32 0.0, %v614
          %v616 = vpop.f32.mrb[0].mxu0
          %v617 = vadd.f32 0.0, %v616
          %618 = vmatprep.mubr.bf16.mxu0 %v490
          %619 = vmatmul.mubr.bf16.gmra.mrb[0].mxu0 %v260
          %v620 = vpop.f32.mrb[0].mxu0
          %v621 = vadd.f32 0.0, %v620
          %v622 = vpop.f32.mrb[0].mxu0
          %v623 = vadd.f32 0.0, %v622
          %v624 = vpop.f32.mrb[0].mxu0
          %v625 = vadd.f32 0.0, %v624
          %v626 = vpop.f32.mrb[0].mxu0
          %v627 = vadd.f32 0.0, %v626
          %628 = vmatprep.mubr.bf16.mxu0 %v493
          %629 = vmatmul.mubr.bf16.gmra.mrb[0].mxu0 %v262
          %v630 = vpop.f32.mrb[0].mxu0
          %v631 = vadd.f32 0.0, %v630
          %v632 = vpop.f32.mrb[0].mxu0
          %v633 = vadd.f32 0.0, %v632
          %v634 = vpop.f32.mrb[0].mxu0
          %v635 = vadd.f32 0.0, %v634
          %v636 = vpop.f32.mrb[0].mxu0
          %v637 = vadd.f32 0.0, %v636
          %638 = vmatprep.mubr.bf16.mxu0 %v496
          %639 = vmatmul.mubr.bf16.gmra.mrb[0].mxu0 %v264
          %v640 = vpop.f32.mrb[0].mxu0
          %v641 = vadd.f32 0.0, %v640
          %v642 = vpop.f32.mrb[0].mxu0
          %v643 = vadd.f32 0.0, %v642
          %v644 = vpop.f32.mrb[0].mxu0
          %v645 = vadd.f32 0.0, %v644
          %v646 = vpop.f32.mrb[0].mxu0
          %v647 = vadd.f32 0.0, %v646
          %648 = vmatprep.mubr.bf16.mxu0 %v499
          %649 = vmatmul.mubr.bf16.gmra.mrb[0].mxu0 %v266
          %v650 = vpop.f32.mrb[0].mxu0
          %v651 = vadd.f32 0.0, %v650
          %v652 = vpop.f32.mrb[0].mxu0
          %v653 = vadd.f32 0.0, %v652
          %v654 = vpop.f32.mrb[0].mxu0
          %v655 = vadd.f32 0.0, %v654
          %v656 = vpop.f32.mrb[0].mxu0
          %v657 = vadd.f32 0.0, %v656
          %658 = vmatprep.mubr.bf16.mxu0 %v502
          %659 = vmatmul.mubr.bf16.gmra.mrb[0].mxu0 %v268
          %v660 = vpop.f32.mrb[0].mxu0
          %v661 = vadd.f32 0.0, %v660
          %v662 = vpop.f32.mrb[0].mxu0
          %v663 = vadd.f32 0.0, %v662
          %v664 = vpop.f32.mrb[0].mxu0
          %v665 = vadd.f32 0.0, %v664
          %v666 = vpop.f32.mrb[0].mxu0
          %v667 = vadd.f32 0.0, %v666
          %668 = vmatprep.mubr.bf16.mxu0 %v505
          %669 = vmatmul.mubr.bf16.gmra.mrb[0].mxu0 %v270
          %v670 = vpop.f32.mrb[0].mxu0
          %v671 = vadd.f32 0.0, %v670
          %v672 = vpop.f32.mrb[0].mxu0
          %v673 = vadd.f32 0.0, %v672
          %v674 = vpop.f32.mrb[0].mxu0
          %v675 = vadd.f32 0.0, %v674
          %v676 = vpop.f32.mrb[0].mxu0
          %v677 = vadd.f32 0.0, %v676
          %678 = vmatprep.mubr.bf16.mxu0 %v508
          %679 = vmatmul.mubr.bf16.gmra.mrb[0].mxu0 %v272
          %v680 = vpop.f32.mrb[0].mxu0
          %v681 = vadd.f32 0.0, %v680
          %v682 = vpop.f32.mrb[0].mxu0
          %v683 = vadd.f32 0.0, %v682
          %v684 = vpop.f32.mrb[0].mxu0
          %v685 = vadd.f32 0.0, %v684
          %v686 = vpop.f32.mrb[0].mxu0
          %v687 = vadd.f32 0.0, %v686
          %688 = vmatprep.mubr.bf16.mxu0 %v511
          %689 = vmatmul.mubr.bf16.gmra.mrb[0].mxu0 %v274
          %v690 = vpop.f32.mrb[0].mxu0
          %v691 = vadd.f32 0.0, %v690
          %v692 = vpop.f32.mrb[0].mxu0
          %v693 = vadd.f32 0.0, %v692
          %v694 = vpop.f32.mrb[0].mxu0
          %v695 = vadd.f32 0.0, %v694
          %v696 = vpop.f32.mrb[0].mxu0
          %v697 = vadd.f32 0.0, %v696
          %698 = vmatprep.mubr.bf16.mxu0 %v514
          %699 = vmatmul.mubr.bf16.gmra.mrb[0].mxu0 %v276
          %v700 = vpop.f32.mrb[0].mxu0
          %v701 = vadd.f32 0.0, %v700
          %v702 = vpop.f32.mrb[0].mxu0
          %v703 = vadd.f32 0.0, %v702
          %v704 = vpop.f32.mrb[0].mxu0
          %v705 = vadd.f32 0.0, %v704
          %v706 = vpop.f32.mrb[0].mxu0
          %v707 = vadd.f32 0.0, %v706
          %708 = vmatprep.mubr.bf16.mxu0 %v517
          %709 = vmatmul.mubr.bf16.gmra.mrb[0].mxu0 %v278
          %v710 = vpop.f32.mrb[0].mxu0
          %v711 = vadd.f32 0.0, %v710
          %v712 = vpop.f32.mrb[0].mxu0
          %v713 = vadd.f32 0.0, %v712
          %v714 = vpop.f32.mrb[0].mxu0
          %v715 = vadd.f32 0.0, %v714
          %v716 = vpop.f32.mrb[0].mxu0
          %v717 = vadd.f32 0.0, %v716
          %718 = vdwg.mxu0
          %v719 = vpack.c.bf16 %v565, %v561
          %v720 = vpack.c.bf16 %v567, %v563
          %v721 = vpack.c.bf16 %v575, %v571
          %v722 = vpack.c.bf16 %v577, %v573
          %v723 = vpack.c.bf16 %v585, %v581
          %v724 = vpack.c.bf16 %v587, %v583
          %v725 = vpack.c.bf16 %v595, %v591
          %v726 = vpack.c.bf16 %v597, %v593
          %v727 = vpack.c.bf16 %v605, %v601
          %v728 = vpack.c.bf16 %v607, %v603
          %v729 = vpack.c.bf16 %v615, %v611
          %v730 = vpack.c.bf16 %v617, %v613
          %v731 = vpack.c.bf16 %v625, %v621
          %v732 = vpack.c.bf16 %v627, %v623
          %v733 = vpack.c.bf16 %v635, %v631
          %v734 = vpack.c.bf16 %v637, %v633
          %v735 = vpack.c.bf16 %v645, %v641
          %v736 = vpack.c.bf16 %v647, %v643
          %v737 = vpack.c.bf16 %v655, %v651
          %v738 = vpack.c.bf16 %v657, %v653
          %v739 = vpack.c.bf16 %v665, %v661
          %v740 = vpack.c.bf16 %v667, %v663
          %v741 = vpack.c.bf16 %v675, %v671
          %v742 = vpack.c.bf16 %v677, %v673
          %v743 = vpack.c.bf16 %v685, %v681
          %v744 = vpack.c.bf16 %v687, %v683
          %v745 = vpack.c.bf16 %v695, %v691
          %v746 = vpack.c.bf16 %v697, %v693
          %v747 = vpack.c.bf16 %v705, %v701
          %v748 = vpack.c.bf16 %v707, %v703
          %v749 = vpack.c.bf16 %v715, %v711
          %v750 = vpack.c.bf16 %v717, %v713
          %v783 = vunpack.c.l.b16 %v719
          %v784 = vunpack.c.l.b16 %v720
          %v785 = vunpack.c.h.b16 %v719
          %v786 = vunpack.c.h.b16 %v720
          %v787 = vunpack.c.l.b16 %v721
          %v788 = vunpack.c.l.b16 %v722
          %v789 = vunpack.c.h.b16 %v721
          %v790 = vunpack.c.h.b16 %v722
          %v791 = vunpack.c.l.b16 %v723
          %v792 = vunpack.c.l.b16 %v724
          %v793 = vunpack.c.h.b16 %v723
          %v794 = vunpack.c.h.b16 %v724
          %v795 = vunpack.c.l.b16 %v725
          %v796 = vunpack.c.l.b16 %v726
          %v797 = vunpack.c.h.b16 %v725
          %v798 = vunpack.c.h.b16 %v726
          %v799 = vunpack.c.l.b16 %v727
          %v800 = vunpack.c.l.b16 %v728
          %v801 = vunpack.c.h.b16 %v727
          %v802 = vunpack.c.h.b16 %v728
          %v803 = vunpack.c.l.b16 %v729
          %v804 = vunpack.c.l.b16 %v730
          %v805 = vunpack.c.h.b16 %v729
          %v806 = vunpack.c.h.b16 %v730
          %v807 = vunpack.c.l.b16 %v731
          %v808 = vunpack.c.l.b16 %v732
          %v809 = vunpack.c.h.b16 %v731
          %v810 = vunpack.c.h.b16 %v732
          %v811 = vunpack.c.l.b16 %v733
          %v812 = vunpack.c.l.b16 %v734
          %v813 = vunpack.c.h.b16 %v733
          %v814 = vunpack.c.h.b16 %v734
          %v815 = vunpack.c.l.b16 %v735
          %v816 = vunpack.c.l.b16 %v736
          %v817 = vunpack.c.h.b16 %v735
          %v818 = vunpack.c.h.b16 %v736
          %v819 = vunpack.c.l.b16 %v737
          %v820 = vunpack.c.l.b16 %v738
          %v821 = vunpack.c.h.b16 %v737
          %v822 = vunpack.c.h.b16 %v738
          %v823 = vunpack.c.l.b16 %v739
          %v824 = vunpack.c.l.b16 %v740
          %v825 = vunpack.c.h.b16 %v739
          %v826 = vunpack.c.h.b16 %v740
          %v827 = vunpack.c.l.b16 %v741
          %v828 = vunpack.c.l.b16 %v742
          %v829 = vunpack.c.h.b16 %v741
          %v830 = vunpack.c.h.b16 %v742
          %v831 = vunpack.c.l.b16 %v743
          %v832 = vunpack.c.l.b16 %v744
          %v833 = vunpack.c.h.b16 %v743
          %v834 = vunpack.c.h.b16 %v744
          %v835 = vunpack.c.l.b16 %v745
          %v836 = vunpack.c.l.b16 %v746
          %v837 = vunpack.c.h.b16 %v745
          %v838 = vunpack.c.h.b16 %v746
          %v839 = vunpack.c.l.b16 %v747
          %v840 = vunpack.c.l.b16 %v748
          %v841 = vunpack.c.h.b16 %v747
          %v842 = vunpack.c.h.b16 %v748
          %v843 = vunpack.c.l.b16 %v749
          %v844 = vunpack.c.l.b16 %v750
          %v845 = vunpack.c.h.b16 %v749
          %v846 = vunpack.c.h.b16 %v750
          %v847 = vpack.c.b16 %v784, %v783
          %v848 = vpack.c.b16 %v786, %v785
          %v849 = vpack.c.b16 %v788, %v787
          %v850 = vpack.c.b16 %v790, %v789
          %v851 = vpack.c.b16 %v792, %v791
          %v852 = vpack.c.b16 %v794, %v793
          %v853 = vpack.c.b16 %v796, %v795
          %v854 = vpack.c.b16 %v798, %v797
          %v855 = vpack.c.b16 %v800, %v799
          %v856 = vpack.c.b16 %v802, %v801
          %v857 = vpack.c.b16 %v804, %v803
          %v858 = vpack.c.b16 %v806, %v805
          %v859 = vpack.c.b16 %v808, %v807
          %v860 = vpack.c.b16 %v810, %v809
          %v861 = vpack.c.b16 %v812, %v811
          %v862 = vpack.c.b16 %v814, %v813
          %v863 = vpack.c.b16 %v816, %v815
          %v864 = vpack.c.b16 %v818, %v817
          %v865 = vpack.c.b16 %v820, %v819
          %v866 = vpack.c.b16 %v822, %v821
          %v867 = vpack.c.b16 %v824, %v823
          %v868 = vpack.c.b16 %v826, %v825
          %v869 = vpack.c.b16 %v828, %v827
          %v870 = vpack.c.b16 %v830, %v829
          %v871 = vpack.c.b16 %v832, %v831
          %v872 = vpack.c.b16 %v834, %v833
          %v873 = vpack.c.b16 %v836, %v835
          %v874 = vpack.c.b16 %v838, %v837
          %v875 = vpack.c.b16 %v840, %v839
          %v876 = vpack.c.b16 %v842, %v841
          %v877 = vpack.c.b16 %v844, %v843
          %v878 = vpack.c.b16 %v846, %v845
          %vm911 = vcmask 1043456
          %vm912 = vcmask 785412
          %vm913 = vmor %vm912, %vm911
          %914 = vst.msk [vmem:[#allocation2] sm:$0xff] %vm913, %v847
          %915 = vst.msk [vmem:[#allocation2 + $0x8] sm:$0xff] %vm913, %v848
          %916 = vst.msk [vmem:[#allocation2 + $0x10] sm:$0xff] %vm913, %v849
          %917 = vst.msk [vmem:[#allocation2 + $0x18] sm:$0xff] %vm913, %v850
          %918 = vst.msk [vmem:[#allocation2 + $0x20] sm:$0xff] %vm913, %v851
          %919 = vst.msk [vmem:[#allocation2 + $0x28] sm:$0xff] %vm913, %v852
          %920 = vst.msk [vmem:[#allocation2 + $0x30] sm:$0xff] %vm913, %v853
          %921 = vst.msk [vmem:[#allocation2 + $0x38] sm:$0xff] %vm913, %v854
          %922 = vst.msk [vmem:[#allocation2 + $0x40] sm:$0xff] %vm913, %v855
          %923 = vst.msk [vmem:[#allocation2 + $0x48] sm:$0xff] %vm913, %v856
          %924 = vst.msk [vmem:[#allocation2 + $0x50] sm:$0xff] %vm913, %v857
          %925 = vst.msk [vmem:[#allocation2 + $0x58] sm:$0xff] %vm913, %v858
          %926 = vst.msk [vmem:[#allocation2 + $0x60] sm:$0xff] %vm913, %v859
          %927 = vst.msk [vmem:[#allocation2 + $0x68] sm:$0xff] %vm913, %v860
          %928 = vst.msk [vmem:[#allocation2 + $0x70] sm:$0xff] %vm913, %v861
          %929 = vst.msk [vmem:[#allocation2 + $0x78] sm:$0xff] %vm913, %v862
          %930 = vst.msk [vmem:[#allocation2 + $0x80] sm:$0xff] %vm913, %v863
          %931 = vst.msk [vmem:[#allocation2 + $0x88] sm:$0xff] %vm913, %v864
          %932 = vst.msk [vmem:[#allocation2 + $0x90] sm:$0xff] %vm913, %v865
          %933 = vst.msk [vmem:[#allocation2 + $0x98] sm:$0xff] %vm913, %v866
          %934 = vst.msk [vmem:[#allocation2 + $0xa0] sm:$0xff] %vm913, %v867
          %935 = vst.msk [vmem:[#allocation2 + $0xa8] sm:$0xff] %vm913, %v868
          %936 = vst.msk [vmem:[#allocation2 + $0xb0] sm:$0xff] %vm913, %v869
          %937 = vst.msk [vmem:[#allocation2 + $0xb8] sm:$0xff] %vm913, %v870
          %938 = vst.msk [vmem:[#allocation2 + $0xc0] sm:$0xff] %vm913, %v871
          %939 = vst.msk [vmem:[#allocation2 + $0xc8] sm:$0xff] %vm913, %v872
          %940 = vst.msk [vmem:[#allocation2 + $0xd0] sm:$0xff] %vm913, %v873
          %941 = vst.msk [vmem:[#allocation2 + $0xd8] sm:$0xff] %vm913, %v874
          %942 = vst.msk [vmem:[#allocation2 + $0xe0] sm:$0xff] %vm913, %v875
          %943 = vst.msk [vmem:[#allocation2 + $0xe8] sm:$0xff] %vm913, %v876
          %944 = vst.msk [vmem:[#allocation2 + $0xf0] sm:$0xff] %vm913, %v877
          %vm945 = vcmask 1040384
          %vm946 = vcmask 782340
          %vm947 = vmor %vm946, %vm945
          %948 = vst.msk [vmem:[#allocation2 + $0xf8] sm:$0x11] %vm947, %v878
          %v949 = vld [vmem:[%s0] sm:$0xff]
          %v950 = vld [vmem:[%s0 + $0x8] sm:$0xff]
          %v951 = vld [vmem:[%s0 + $0x10] sm:$0xff]
          %v952 = vld [vmem:[%s0 + $0x18] sm:$0xff]
          %v953 = vld [vmem:[%s0 + $0x20] sm:$0xff]
          %v954 = vld [vmem:[%s0 + $0x28] sm:$0xff]
          %v955 = vld [vmem:[%s0 + $0x30] sm:$0xff]
          %v956 = vld [vmem:[%s0 + $0x38] sm:$0xff]
          %v957 = vld [vmem:[%s0 + $0x40] sm:$0xff]
          %v958 = vld [vmem:[%s0 + $0x48] sm:$0xff]
          %v959 = vld [vmem:[%s0 + $0x50] sm:$0xff]
          %v960 = vld [vmem:[%s0 + $0x58] sm:$0xff]
          %v961 = vld [vmem:[%s0 + $0x60] sm:$0xff]
          %v962 = vld [vmem:[%s0 + $0x68] sm:$0xff]
          %v963 = vld [vmem:[%s0 + $0x70] sm:$0xff]
          %v964 = vld [vmem:[%s0 + $0x78] sm:$0xff]
          %v965 = vld [vmem:[%s0 + $0x80] sm:$0xff]
          %v966 = vld [vmem:[%s0 + $0x88] sm:$0xff]
          %v967 = vld [vmem:[%s0 + $0x90] sm:$0xff]
          %v968 = vld [vmem:[%s0 + $0x98] sm:$0xff]
          %v969 = vld [vmem:[%s0 + $0xa0] sm:$0xff]
          %v970 = vld [vmem:[%s0 + $0xa8] sm:$0xff]
          %v971 = vld [vmem:[%s0 + $0xb0] sm:$0xff]
          %v972 = vld [vmem:[%s0 + $0xb8] sm:$0xff]
          %v973 = vld [vmem:[%s0 + $0xc0] sm:$0xff]
          %v974 = vld [vmem:[%s0 + $0xc8] sm:$0xff]
          %v975 = vld [vmem:[%s0 + $0xd0] sm:$0xff]
          %v976 = vld [vmem:[%s0 + $0xd8] sm:$0xff]
          %v977 = vld [vmem:[#allocation2] sm:$0xff]
          %v978 = vld [vmem:[#allocation2 + $0x8] sm:$0xff]
          %v979 = vld [vmem:[#allocation2 + $0x10] sm:$0xff]
          %v980 = vld [vmem:[#allocation2 + $0x18] sm:$0xff]
          %v981 = vld [vmem:[#allocation2 + $0x20] sm:$0xff]
          %v982 = vld [vmem:[#allocation2 + $0x28] sm:$0xff]
          %v983 = vld [vmem:[#allocation2 + $0x30] sm:$0xff]
          %v984 = vld [vmem:[#allocation2 + $0x38] sm:$0xff]
          %v985 = vld [vmem:[#allocation2 + $0x40] sm:$0xff]
          %v986 = vld [vmem:[#allocation2 + $0x48] sm:$0xff]
          %v987 = vld [vmem:[#allocation2 + $0x50] sm:$0xff]
          %v988 = vld [vmem:[#allocation2 + $0x58] sm:$0xff]
          %v989 = vld [vmem:[#allocation2 + $0x60] sm:$0xff]
          %v990 = vld [vmem:[#allocation2 + $0x68] sm:$0xff]
          %v991 = vld [vmem:[#allocation2 + $0x70] sm:$0xff]
          %v992 = vld [vmem:[#allocation2 + $0x78] sm:$0xff]
          %v993 = vld [vmem:[#allocation2 + $0x80] sm:$0xff]
          %v994 = vld [vmem:[#allocation2 + $0x88] sm:$0xff]
          %v995 = vld [vmem:[#allocation2 + $0x90] sm:$0xff]
          %v996 = vld [vmem:[#allocation2 + $0x98] sm:$0xff]
          %v997 = vld [vmem:[#allocation2 + $0xa0] sm:$0xff]
          %v998 = vld [vmem:[#allocation2 + $0xa8] sm:$0xff]
          %v999 = vld [vmem:[#allocation2 + $0xb0] sm:$0xff]
          %v1000 = vld [vmem:[#allocation2 + $0xb8] sm:$0xff]
          %v1001 = vld [vmem:[#allocation2 + $0xc0] sm:$0xff]
          %v1002 = vld [vmem:[#allocation2 + $0xc8] sm:$0xff]
          %v1003 = vld [vmem:[#allocation2 + $0xd0] sm:$0xff]
          %v1004 = vld [vmem:[#allocation2 + $0xd8] sm:$0xff]
          %v1005 = vld [vmem:[#allocation2 + $0xe0] sm:$0xff]
          %v1006 = vld [vmem:[#allocation2 + $0xe8] sm:$0xff]
          %v1007 = vld [vmem:[#allocation2 + $0xf0] sm:$0xff]
          %v1008 = vld [vmem:[#allocation2 + $0xf8] sm:$0x11]
          %v1037 = vunpack.c.l.b16 %v949
          %v1038 = vunpack.c.h.b16 %v949
          %v1039 = vunpack.c.l.b16 %v950
          %v1040 = vunpack.c.h.b16 %v950
          %v1041 = vunpack.c.l.b16 %v951
          %v1042 = vunpack.c.h.b16 %v951
          %v1043 = vunpack.c.l.b16 %v952
          %v1044 = vunpack.c.h.b16 %v952
          %v1045 = vunpack.c.l.b16 %v953
          %v1046 = vunpack.c.h.b16 %v953
          %v1047 = vunpack.c.l.b16 %v954
          %v1048 = vunpack.c.h.b16 %v954
          %v1049 = vunpack.c.l.b16 %v955
          %v1050 = vunpack.c.h.b16 %v955
          %v1051 = vunpack.c.l.b16 %v956
          %v1052 = vunpack.c.h.b16 %v956
          %v1053 = vunpack.c.l.b16 %v957
          %v1054 = vunpack.c.h.b16 %v957
          %v1055 = vunpack.c.l.b16 %v958
          %v1056 = vunpack.c.h.b16 %v958
          %v1057 = vunpack.c.l.b16 %v959
          %v1058 = vunpack.c.h.b16 %v959
          %v1059 = vunpack.c.l.b16 %v960
          %v1060 = vunpack.c.h.b16 %v960
          %v1061 = vunpack.c.l.b16 %v961
          %v1062 = vunpack.c.h.b16 %v961
          %v1063 = vunpack.c.l.b16 %v962
          %v1064 = vunpack.c.h.b16 %v962
          %v1065 = vunpack.c.l.b16 %v963
          %v1066 = vunpack.c.h.b16 %v963
          %v1067 = vunpack.c.l.b16 %v964
          %v1068 = vunpack.c.h.b16 %v964
          %v1069 = vunpack.c.l.b16 %v965
          %v1070 = vunpack.c.h.b16 %v965
          %v1071 = vunpack.c.l.b16 %v966
          %v1072 = vunpack.c.h.b16 %v966
          %v1073 = vunpack.c.l.b16 %v967
          %v1074 = vunpack.c.h.b16 %v967
          %v1075 = vunpack.c.l.b16 %v968
          %v1076 = vunpack.c.h.b16 %v968
          %v1077 = vunpack.c.l.b16 %v969
          %v1078 = vunpack.c.h.b16 %v969
          %v1079 = vunpack.c.l.b16 %v970
          %v1080 = vunpack.c.h.b16 %v970
          %v1081 = vunpack.c.l.b16 %v971
          %v1082 = vunpack.c.h.b16 %v971
          %v1083 = vunpack.c.l.b16 %v972
          %v1084 = vunpack.c.h.b16 %v972
          %v1085 = vunpack.c.l.b16 %v973
          %v1086 = vunpack.c.h.b16 %v973
          %v1087 = vunpack.c.l.b16 %v974
          %v1088 = vunpack.c.h.b16 %v974
          %v1089 = vunpack.c.l.b16 %v975
          %v1090 = vunpack.c.h.b16 %v975
          %v1091 = vunpack.c.l.b16 %v976
          %v1092 = vunpack.c.h.b16 %v976
          %v1093 = vpack.c.b16 %v1039, %v1037
          %v1094 = vpack.c.b16 %v1040, %v1038
          %v1095 = vpack.c.b16 %v1043, %v1041
          %v1096 = vpack.c.b16 %v1044, %v1042
          %v1097 = vpack.c.b16 %v1047, %v1045
          %v1098 = vpack.c.b16 %v1048, %v1046
          %v1099 = vpack.c.b16 %v1051, %v1049
          %v1100 = vpack.c.b16 %v1052, %v1050
          %v1101 = vpack.c.b16 %v1055, %v1053
          %v1102 = vpack.c.b16 %v1056, %v1054
          %v1103 = vpack.c.b16 %v1059, %v1057
          %v1104 = vpack.c.b16 %v1060, %v1058
          %v1105 = vpack.c.b16 %v1063, %v1061
          %v1106 = vpack.c.b16 %v1064, %v1062
          %v1107 = vpack.c.b16 %v1067, %v1065
          %v1108 = vpack.c.b16 %v1068, %v1066
          %v1109 = vpack.c.b16 %v1071, %v1069
          %v1110 = vpack.c.b16 %v1072, %v1070
          %v1111 = vpack.c.b16 %v1075, %v1073
          %v1112 = vpack.c.b16 %v1076, %v1074
          %v1113 = vpack.c.b16 %v1079, %v1077
          %v1114 = vpack.c.b16 %v1080, %v1078
          %v1115 = vpack.c.b16 %v1083, %v1081
          %v1116 = vpack.c.b16 %v1084, %v1082
          %v1117 = vpack.c.b16 %v1087, %v1085
          %v1118 = vpack.c.b16 %v1088, %v1086
          %v1119 = vpack.c.b16 %v1091, %v1089
          %v1120 = vpack.c.b16 %v1092, %v1090
          %v1167 = vunpack.c.l.b16 %v977
          %v1168 = vunpack.c.h.b16 %v977
          %v1169 = vunpack.c.l.b16 %v978
          %v1170 = vunpack.c.h.b16 %v978
          %v1171 = vunpack.c.l.b16 %v979
          %v1172 = vunpack.c.h.b16 %v979
          %v1173 = vunpack.c.l.b16 %v980
          %v1174 = vunpack.c.h.b16 %v980
          %v1175 = vunpack.c.l.b16 %v981
          %v1176 = vunpack.c.h.b16 %v981
          %v1177 = vunpack.c.l.b16 %v982
          %v1178 = vunpack.c.h.b16 %v982
          %v1179 = vunpack.c.l.b16 %v983
          %v1180 = vunpack.c.h.b16 %v983
          %v1181 = vunpack.c.l.b16 %v984
          %v1182 = vunpack.c.h.b16 %v984
          %v1183 = vunpack.c.l.b16 %v985
          %v1184 = vunpack.c.h.b16 %v985
          %v1185 = vunpack.c.l.b16 %v986
          %v1186 = vunpack.c.h.b16 %v986
          %v1187 = vunpack.c.l.b16 %v987
          %v1188 = vunpack.c.h.b16 %v987
          %v1189 = vunpack.c.l.b16 %v988
          %v1190 = vunpack.c.h.b16 %v988
          %v1191 = vunpack.c.l.b16 %v989
          %v1192 = vunpack.c.h.b16 %v989
          %v1193 = vunpack.c.l.b16 %v990
          %v1194 = vunpack.c.h.b16 %v990
          %v1195 = vunpack.c.l.b16 %v991
          %v1196 = vunpack.c.h.b16 %v991
          %v1197 = vunpack.c.l.b16 %v992
          %v1198 = vunpack.c.h.b16 %v992
          %v1199 = vunpack.c.l.b16 %v993
          %v1200 = vunpack.c.h.b16 %v993
          %v1201 = vunpack.c.l.b16 %v994
          %v1202 = vunpack.c.h.b16 %v994
          %v1203 = vunpack.c.l.b16 %v995
          %v1204 = vunpack.c.h.b16 %v995
          %v1205 = vunpack.c.l.b16 %v996
          %v1206 = vunpack.c.h.b16 %v996
          %v1207 = vunpack.c.l.b16 %v997
          %v1208 = vunpack.c.h.b16 %v997
          %v1209 = vunpack.c.l.b16 %v998
          %v1210 = vunpack.c.h.b16 %v998
          %v1211 = vunpack.c.l.b16 %v999
          %v1212 = vunpack.c.h.b16 %v999
          %v1213 = vunpack.c.l.b16 %v1000
          %v1214 = vunpack.c.h.b16 %v1000
          %v1215 = vunpack.c.l.b16 %v1001
          %v1216 = vunpack.c.h.b16 %v1001
          %v1217 = vunpack.c.l.b16 %v1002
          %v1218 = vunpack.c.h.b16 %v1002
          %v1219 = vunpack.c.l.b16 %v1003
          %v1220 = vunpack.c.h.b16 %v1003
          %v1221 = vunpack.c.l.b16 %v1004
          %v1222 = vunpack.c.h.b16 %v1004
          %v1223 = vunpack.c.l.b16 %v1005
          %v1224 = vunpack.c.h.b16 %v1005
          %v1225 = vunpack.c.l.b16 %v1006
          %v1226 = vunpack.c.h.b16 %v1006
          %v1227 = vunpack.c.l.b16 %v1007
          %v1228 = vunpack.c.h.b16 %v1007
          %v1229 = vunpack.c.l.b16 %v1008
          %v1230 = vunpack.c.h.b16 %v1008
          %v1231 = vpack.c.b16 %v1169, %v1167
          %v1232 = vpack.c.b16 %v1170, %v1168
          %v1233 = vpack.c.b16 %v1173, %v1171
          %v1234 = vpack.c.b16 %v1174, %v1172
          %v1235 = vpack.c.b16 %v1177, %v1175
          %v1236 = vpack.c.b16 %v1178, %v1176
          %v1237 = vpack.c.b16 %v1181, %v1179
          %v1238 = vpack.c.b16 %v1182, %v1180
          %v1239 = vpack.c.b16 %v1185, %v1183
          %v1240 = vpack.c.b16 %v1186, %v1184
          %v1241 = vpack.c.b16 %v1189, %v1187
          %v1242 = vpack.c.b16 %v1190, %v1188
          %v1243 = vpack.c.b16 %v1193, %v1191
          %v1244 = vpack.c.b16 %v1194, %v1192
          %v1245 = vpack.c.b16 %v1197, %v1195
          %v1246 = vpack.c.b16 %v1198, %v1196
          %v1247 = vpack.c.b16 %v1201, %v1199
          %v1248 = vpack.c.b16 %v1202, %v1200
          %v1249 = vpack.c.b16 %v1205, %v1203
          %v1250 = vpack.c.b16 %v1206, %v1204
          %v1251 = vpack.c.b16 %v1209, %v1207
          %v1252 = vpack.c.b16 %v1210, %v1208
          %v1253 = vpack.c.b16 %v1213, %v1211
          %v1254 = vpack.c.b16 %v1214, %v1212
          %v1255 = vpack.c.b16 %v1217, %v1215
          %v1256 = vpack.c.b16 %v1218, %v1216
          %v1257 = vpack.c.b16 %v1221, %v1219
          %v1258 = vpack.c.b16 %v1222, %v1220
          %v1259 = vpack.c.b16 %v1225, %v1223
          %v1260 = vpack.c.b16 %v1226, %v1224
          %v1261 = vpack.c.b16 %v1229, %v1227
          %v1262 = vpack.c.b16 %v1230, %v1228
          %v1294 = vsel %vm470, %v1094, 0
          %v1297 = vsel %vm470, %v1096, 0
          %v1300 = vsel %vm470, %v1098, 0
          %v1303 = vsel %vm470, %v1100, 0
          %v1306 = vsel %vm470, %v1102, 0
          %v1309 = vsel %vm470, %v1104, 0
          %v1312 = vsel %vm470, %v1106, 0
          %v1315 = vsel %vm470, %v1108, 0
          %v1318 = vsel %vm470, %v1110, 0
          %v1321 = vsel %vm470, %v1112, 0
          %v1324 = vsel %vm470, %v1114, 0
          %v1327 = vsel %vm470, %v1116, 0
          %v1330 = vsel %vm470, %v1118, 0
          %v1333 = vsel %vm470, %v1120, 0
          %v1336 = vsel %vm519, %v1261, 0
          %v1339 = vsel %vm519, %v1262, 0
          %1341 = vmatprep.subr.bf16.mxu0 %v1232
          %1342 = vmatpush1.bf16.msra.mxu0 %v1231
          %1343 = vmatprep.subr.bf16.mxu0 %v1234
          %1344 = vmatpush1.bf16.msra.mxu0 %v1233
          %1345 = vmatprep.subr.bf16.mxu0 %v1236
          %1346 = vmatpush1.bf16.msra.mxu0 %v1235
          %1347 = vmatprep.subr.bf16.mxu0 %v1238
          %1348 = vmatpush1.bf16.msra.mxu0 %v1237
          %1349 = vmatprep.subr.bf16.mxu0 %v1240
          %1350 = vmatpush1.bf16.msra.mxu0 %v1239
          %1351 = vmatprep.subr.bf16.mxu0 %v1242
          %1352 = vmatpush1.bf16.msra.mxu0 %v1241
          %1353 = vmatprep.subr.bf16.mxu0 %v1244
          %1354 = vmatpush1.bf16.msra.mxu0 %v1243
          %1355 = vmatprep.subr.bf16.mxu0 %v1246
          %1356 = vmatpush1.bf16.msra.mxu0 %v1245
          %1357 = vmatprep.subr.bf16.mxu0 %v1248
          %1358 = vmatpush1.bf16.msra.mxu0 %v1247
          %1359 = vmatprep.subr.bf16.mxu0 %v1250
          %1360 = vmatpush1.bf16.msra.mxu0 %v1249
          %1361 = vmatprep.subr.bf16.mxu0 %v1252
          %1362 = vmatpush1.bf16.msra.mxu0 %v1251
          %1363 = vmatprep.subr.bf16.mxu0 %v1254
          %1364 = vmatpush1.bf16.msra.mxu0 %v1253
          %1365 = vmatprep.subr.bf16.mxu0 %v1256
          %1366 = vmatpush1.bf16.msra.mxu0 %v1255
          %1367 = vmatprep.subr.bf16.mxu0 %v1258
          %1368 = vmatpush1.bf16.msra.mxu0 %v1257
          %1369 = vmatprep.subr.bf16.mxu0 %v1260
          %1370 = vmatpush1.bf16.msra.mxu0 %v1259
          %1371 = vmatprep.subr.bf16.mxu0 %v1339
          %1372 = vmatpush1.bf16.msra.mxu0 %v1336
          %1373 = vmatprep.mubr.bf16.mxu0 %v1294
          %1374 = vmatmul.mubr.bf16.gmra.mrb[0].mxu0 %v1093
          %v1375 = vpop.f32.mrb[0].mxu0
          %v1376 = vadd.f32 0.0, %v1375
          %v1377 = vpop.f32.mrb[0].mxu0
          %v1378 = vadd.f32 0.0, %v1377
          %v1379 = vpop.f32.mrb[0].mxu0
          %v1380 = vadd.f32 0.0, %v1379
          %v1381 = vpop.f32.mrb[0].mxu0
          %v1382 = vadd.f32 0.0, %v1381
          %1383 = vmatprep.mubr.bf16.mxu0 %v1297
          %1384 = vmatmul.mubr.bf16.gmra.mrb[0].mxu0 %v1095
          %v1385 = vpop.f32.mrb[0].mxu0
          %v1386 = vadd.f32 0.0, %v1385
          %v1387 = vpop.f32.mrb[0].mxu0
          %v1388 = vadd.f32 0.0, %v1387
          %v1389 = vpop.f32.mrb[0].mxu0
          %v1390 = vadd.f32 0.0, %v1389
          %v1391 = vpop.f32.mrb[0].mxu0
          %v1392 = vadd.f32 0.0, %v1391
          %1393 = vmatprep.mubr.bf16.mxu0 %v1300
          %1394 = vmatmul.mubr.bf16.gmra.mrb[0].mxu0 %v1097
          %v1395 = vpop.f32.mrb[0].mxu0
          %v1396 = vadd.f32 0.0, %v1395
          %v1397 = vpop.f32.mrb[0].mxu0
          %v1398 = vadd.f32 0.0, %v1397
          %v1399 = vpop.f32.mrb[0].mxu0
          %v1400 = vadd.f32 0.0, %v1399
          %v1401 = vpop.f32.mrb[0].mxu0
          %v1402 = vadd.f32 0.0, %v1401
          %1403 = vmatprep.mubr.bf16.mxu0 %v1303
          %1404 = vmatmul.mubr.bf16.gmra.mrb[0].mxu0 %v1099
          %v1405 = vpop.f32.mrb[0].mxu0
          %v1406 = vadd.f32 0.0, %v1405
          %v1407 = vpop.f32.mrb[0].mxu0
          %v1408 = vadd.f32 0.0, %v1407
          %v1409 = vpop.f32.mrb[0].mxu0
          %v1410 = vadd.f32 0.0, %v1409
          %v1411 = vpop.f32.mrb[0].mxu0
          %v1412 = vadd.f32 0.0, %v1411
          %1413 = vmatprep.mubr.bf16.mxu0 %v1306
          %1414 = vmatmul.mubr.bf16.gmra.mrb[0].mxu0 %v1101
          %v1415 = vpop.f32.mrb[0].mxu0
          %v1416 = vadd.f32 0.0, %v1415
          %v1417 = vpop.f32.mrb[0].mxu0
          %v1418 = vadd.f32 0.0, %v1417
          %v1419 = vpop.f32.mrb[0].mxu0
          %v1420 = vadd.f32 0.0, %v1419
          %v1421 = vpop.f32.mrb[0].mxu0
          %v1422 = vadd.f32 0.0, %v1421
          %1423 = vmatprep.mubr.bf16.mxu0 %v1309
          %1424 = vmatmul.mubr.bf16.gmra.mrb[0].mxu0 %v1103
          %v1425 = vpop.f32.mrb[0].mxu0
          %v1426 = vadd.f32 0.0, %v1425
          %v1427 = vpop.f32.mrb[0].mxu0
          %v1428 = vadd.f32 0.0, %v1427
          %v1429 = vpop.f32.mrb[0].mxu0
          %v1430 = vadd.f32 0.0, %v1429
          %v1431 = vpop.f32.mrb[0].mxu0
          %v1432 = vadd.f32 0.0, %v1431
          %1433 = vmatprep.mubr.bf16.mxu0 %v1312
          %1434 = vmatmul.mubr.bf16.gmra.mrb[0].mxu0 %v1105
          %v1435 = vpop.f32.mrb[0].mxu0
          %v1436 = vadd.f32 0.0, %v1435
          %v1437 = vpop.f32.mrb[0].mxu0
          %v1438 = vadd.f32 0.0, %v1437
          %v1439 = vpop.f32.mrb[0].mxu0
          %v1440 = vadd.f32 0.0, %v1439
          %v1441 = vpop.f32.mrb[0].mxu0
          %v1442 = vadd.f32 0.0, %v1441
          %1443 = vmatprep.mubr.bf16.mxu0 %v1315
          %1444 = vmatmul.mubr.bf16.gmra.mrb[0].mxu0 %v1107
          %v1445 = vpop.f32.mrb[0].mxu0
          %v1446 = vadd.f32 0.0, %v1445
          %v1447 = vpop.f32.mrb[0].mxu0
          %v1448 = vadd.f32 0.0, %v1447
          %v1449 = vpop.f32.mrb[0].mxu0
          %v1450 = vadd.f32 0.0, %v1449
          %v1451 = vpop.f32.mrb[0].mxu0
          %v1452 = vadd.f32 0.0, %v1451
          %1453 = vmatprep.mubr.bf16.mxu0 %v1318
          %1454 = vmatmul.mubr.bf16.gmra.mrb[0].mxu0 %v1109
          %v1455 = vpop.f32.mrb[0].mxu0
          %v1456 = vadd.f32 0.0, %v1455
          %v1457 = vpop.f32.mrb[0].mxu0
          %v1458 = vadd.f32 0.0, %v1457
          %v1459 = vpop.f32.mrb[0].mxu0
          %v1460 = vadd.f32 0.0, %v1459
          %v1461 = vpop.f32.mrb[0].mxu0
          %v1462 = vadd.f32 0.0, %v1461
          %1463 = vmatprep.mubr.bf16.mxu0 %v1321
          %1464 = vmatmul.mubr.bf16.gmra.mrb[0].mxu0 %v1111
          %v1465 = vpop.f32.mrb[0].mxu0
          %v1466 = vadd.f32 0.0, %v1465
          %v1467 = vpop.f32.mrb[0].mxu0
          %v1468 = vadd.f32 0.0, %v1467
          %v1469 = vpop.f32.mrb[0].mxu0
          %v1470 = vadd.f32 0.0, %v1469
          %v1471 = vpop.f32.mrb[0].mxu0
          %v1472 = vadd.f32 0.0, %v1471
          %1473 = vmatprep.mubr.bf16.mxu0 %v1324
          %1474 = vmatmul.mubr.bf16.gmra.mrb[0].mxu0 %v1113
          %v1475 = vpop.f32.mrb[0].mxu0
          %v1476 = vadd.f32 0.0, %v1475
          %v1477 = vpop.f32.mrb[0].mxu0
          %v1478 = vadd.f32 0.0, %v1477
          %v1479 = vpop.f32.mrb[0].mxu0
          %v1480 = vadd.f32 0.0, %v1479
          %v1481 = vpop.f32.mrb[0].mxu0
          %v1482 = vadd.f32 0.0, %v1481
          %1483 = vmatprep.mubr.bf16.mxu0 %v1327
          %1484 = vmatmul.mubr.bf16.gmra.mrb[0].mxu0 %v1115
          %v1485 = vpop.f32.mrb[0].mxu0
          %v1486 = vadd.f32 0.0, %v1485
          %v1487 = vpop.f32.mrb[0].mxu0
          %v1488 = vadd.f32 0.0, %v1487
          %v1489 = vpop.f32.mrb[0].mxu0
          %v1490 = vadd.f32 0.0, %v1489
          %v1491 = vpop.f32.mrb[0].mxu0
          %v1492 = vadd.f32 0.0, %v1491
          %1493 = vmatprep.mubr.bf16.mxu0 %v1330
          %1494 = vmatmul.mubr.bf16.gmra.mrb[0].mxu0 %v1117
          %v1495 = vpop.f32.mrb[0].mxu0
          %v1496 = vadd.f32 0.0, %v1495
          %v1497 = vpop.f32.mrb[0].mxu0
          %v1498 = vadd.f32 0.0, %v1497
          %v1499 = vpop.f32.mrb[0].mxu0
          %v1500 = vadd.f32 0.0, %v1499
          %v1501 = vpop.f32.mrb[0].mxu0
          %v1502 = vadd.f32 0.0, %v1501
          %1503 = vmatprep.mubr.bf16.mxu0 %v1333
          %1504 = vmatmul.mubr.bf16.gmra.mrb[0].mxu0 %v1119
          %v1505 = vpop.f32.mrb[0].mxu0
          %v1506 = vadd.f32 0.0, %v1505
          %v1507 = vpop.f32.mrb[0].mxu0
          %v1508 = vadd.f32 0.0, %v1507
          %v1509 = vpop.f32.mrb[0].mxu0
          %v1510 = vadd.f32 0.0, %v1509
          %v1511 = vpop.f32.mrb[0].mxu0
          %v1512 = vadd.f32 0.0, %v1511
          %1513 = vdwg.mxu0
          %s1514 = smul.u32 %s176, 56
          %s1515 = smul.addr %s1514, 8
          %s1516 = scalar_lea.vmem %s166, %s1515 [#allocation3]
          %1517 = vst [vmem:[%s1516] sm:$0xff] %v1376
          %vm1518 = vcmask 785408
          %1519 = vst.msk [vmem:[%s1516 + $0x8] sm:$0xff] %vm1518, %v1378
          %1520 = vst [vmem:[%s1516 + $0x10] sm:$0xff] %v1380
          %1521 = vst.msk [vmem:[%s1516 + $0x18] sm:$0xff] %vm1518, %v1382
          %1522 = vst [vmem:[%s1516 + $0x20] sm:$0xff] %v1386
          %1523 = vst.msk [vmem:[%s1516 + $0x28] sm:$0xff] %vm1518, %v1388
          %1524 = vst [vmem:[%s1516 + $0x30] sm:$0xff] %v1390
          %1525 = vst.msk [vmem:[%s1516 + $0x38] sm:$0xff] %vm1518, %v1392
          %1526 = vst [vmem:[%s1516 + $0x40] sm:$0xff] %v1396
          %1527 = vst.msk [vmem:[%s1516 + $0x48] sm:$0xff] %vm1518, %v1398
          %1528 = vst [vmem:[%s1516 + $0x50] sm:$0xff] %v1400
          %1529 = vst.msk [vmem:[%s1516 + $0x58] sm:$0xff] %vm1518, %v1402
          %1530 = vst [vmem:[%s1516 + $0x60] sm:$0xff] %v1406
          %1531 = vst.msk [vmem:[%s1516 + $0x68] sm:$0xff] %vm1518, %v1408
          %1532 = vst [vmem:[%s1516 + $0x70] sm:$0xff] %v1410
          %1533 = vst.msk [vmem:[%s1516 + $0x78] sm:$0xff] %vm1518, %v1412
          %1534 = vst [vmem:[%s1516 + $0x80] sm:$0xff] %v1416
          %1535 = vst.msk [vmem:[%s1516 + $0x88] sm:$0xff] %vm1518, %v1418
          %1536 = vst [vmem:[%s1516 + $0x90] sm:$0xff] %v1420
          %1537 = vst.msk [vmem:[%s1516 + $0x98] sm:$0xff] %vm1518, %v1422
          %1538 = vst [vmem:[%s1516 + $0xa0] sm:$0xff] %v1426
          %1539 = vst.msk [vmem:[%s1516 + $0xa8] sm:$0xff] %vm1518, %v1428
          %1540 = vst [vmem:[%s1516 + $0xb0] sm:$0xff] %v1430
          %1541 = vst.msk [vmem:[%s1516 + $0xb8] sm:$0xff] %vm1518, %v1432
          %1542 = vst [vmem:[%s1516 + $0xc0] sm:$0xff] %v1436
          %1543 = vst.msk [vmem:[%s1516 + $0xc8] sm:$0xff] %vm1518, %v1438
          %1544 = vst [vmem:[%s1516 + $0xd0] sm:$0xff] %v1440
          %1545 = vst.msk [vmem:[%s1516 + $0xd8] sm:$0xff] %vm1518, %v1442
          %1546 = vst [vmem:[%s1516 + $0xe0] sm:$0xff] %v1446
          %1547 = vst.msk [vmem:[%s1516 + $0xe8] sm:$0xff] %vm1518, %v1448
          %1548 = vst [vmem:[%s1516 + $0xf0] sm:$0xff] %v1450
          %1549 = vst.msk [vmem:[%s1516 + $0xf8] sm:$0xff] %vm1518, %v1452
          %1550 = vst [vmem:[%s1516 + $0x100] sm:$0xff] %v1456
          %1551 = vst.msk [vmem:[%s1516 + $0x108] sm:$0xff] %vm1518, %v1458
          %1552 = vst [vmem:[%s1516 + $0x110] sm:$0xff] %v1460
          %1553 = vst.msk [vmem:[%s1516 + $0x118] sm:$0xff] %vm1518, %v1462
          %1554 = vst [vmem:[%s1516 + $0x120] sm:$0xff] %v1466
          %1555 = vst.msk [vmem:[%s1516 + $0x128] sm:$0xff] %vm1518, %v1468
          %1556 = vst [vmem:[%s1516 + $0x130] sm:$0xff] %v1470
          %1557 = vst.msk [vmem:[%s1516 + $0x138] sm:$0xff] %vm1518, %v1472
          %1558 = vst [vmem:[%s1516 + $0x140] sm:$0xff] %v1476
          %1559 = vst.msk [vmem:[%s1516 + $0x148] sm:$0xff] %vm1518, %v1478
          %1560 = vst [vmem:[%s1516 + $0x150] sm:$0xff] %v1480
          %1561 = vst.msk [vmem:[%s1516 + $0x158] sm:$0xff] %vm1518, %v1482
          %1562 = vst [vmem:[%s1516 + $0x160] sm:$0xff] %v1486
          %1563 = vst.msk [vmem:[%s1516 + $0x168] sm:$0xff] %vm1518, %v1488
          %1564 = vst [vmem:[%s1516 + $0x170] sm:$0xff] %v1490
          %1565 = vst.msk [vmem:[%s1516 + $0x178] sm:$0xff] %vm1518, %v1492
          %1566 = vst [vmem:[%s1516 + $0x180] sm:$0xff] %v1496
          %1567 = vst.msk [vmem:[%s1516 + $0x188] sm:$0xff] %vm1518, %v1498
          %1568 = vst [vmem:[%s1516 + $0x190] sm:$0xff] %v1500
          %1569 = vst.msk [vmem:[%s1516 + $0x198] sm:$0xff] %vm1518, %v1502
          %1570 = vst [vmem:[%s1516 + $0x1a0] sm:$0xff] %v1506
          %1571 = vst.msk [vmem:[%s1516 + $0x1a8] sm:$0xff] %vm1518, %v1508
          %1572 = vst [vmem:[%s1516 + $0x1b0] sm:$0xff] %v1510
          %1573 = vst.msk [vmem:[%s1516 + $0x1b8] sm:$0xff] %vm1518, %v1512
        $region37: #{ppr_forward.1} parent=31 // loop_footer
          %s180 = sadd.s32 1, %s176
        $region38: #{ppr_forward.1} parent=31 // loop_footer_branch
          %175 = sbr.rel target = $region34
        $region39: #{ppr_forward.1} parent=31 // loop_exit
          _
        %s1574 = sand.u32 %s93, 1
        %s1575 = scalar_lea.sflag [#allocation4], %s1574
        %s1576 = sand.u32 %s93, 1
        %s1577 = smul.addr %s1576, 1344
        %s1578 = scalar_lea.vmem [#allocation3], %s1577
        // Predicated region
        $region40: #{ppr_forward.1} parent=31 // pred_check
          %p1579 = pneg %p103
        $region41: #{ppr_forward.1} parent=31 // pred_check_branch
          %1581 = sbr.rel (%p1579) target = $region43
        $region42: #{ppr_forward.1} parent=31 // pred_region
          %s1582 = smul.u32 3, %s17
          %s1584 = ssub.s32 21504, 21504
          %1585 = vsyncadd %s1575, %s1584
          %s1586 = smul.addr %s1582, 56
          %s1587 = smul.addr %s1586, 128
          %s1588 = scalar_lea.hbm %s3, %s1587
          %s1589 = sshll.u32 %s1578, 4
          %s1590 = int_to_ptr.vmem [resolvable:$true] %s1589
          %1595 = dma.vmem_to_hbm [thread:$0]  %s1590, 21504, %s1588, %s1575, 256, 256, 16
        $region43: #{ppr_forward.1} parent=31 // pred_fallthru
          _
      $region32: #{ppr_forward.1} parent=5 // pred_fallthru
        _
      %p1596 = scmp.le.s32.totalorder 2, %s12
      // Predicated region
      $region44: #{ppr_forward.1} parent=5 // pred_check
        %p1597 = pneg %p1596
      $region45: #{ppr_forward.1} parent=5 // pred_check_branch
        %1599 = sbr.rel (%p1597) target = $region47
      $region46: #{ppr_forward.1} parent=5 // pred_region
        %s1600 = ssub.s32 %s12, 2
        // Predicated region
        $region48: #{ppr_forward.1} parent=46 // pred_check
          %p1601 = pneg %p109
        $region49: #{ppr_forward.1} parent=46 // pred_check_branch
          %1603 = sbr.rel (%p1601) target = $region51
        $region50: #{ppr_forward.1} parent=46 // pred_region
          %s1604 = sand.u32 %s94, 1
          %s1605 = scalar_lea.sflag [#allocation4], %s1604
          %s1606 = sand.u32 %s94, 1
          %s1607 = smul.addr %s1606, 1344
          %s1608 = scalar_lea.vmem [#allocation3], %s1607
          %1609 = dma.done %s1605, 21504
        $region51: #{ppr_forward.1} parent=46 // pred_fallthru
          _
      $region47: #{ppr_forward.1} parent=5 // pred_fallthru
        _
    $region6: #{ppr_forward.1} parent=1 // loop_footer
      %s16 = sadd.s32 1, %s12
    $region7: #{ppr_forward.1} parent=1 // loop_footer_branch
      %11 = sbr.rel target = $region3
    $region8: #{ppr_forward.1} parent=1 // loop_exit
      _
    %1610 = vsyncpa [#allocation4], 1
    %s1611 = scalar_lea.sflag [#allocation4], 1
    %1612 = vsyncpa %s1611, 1

</llo_original>
